<compile_context>
chip_gen: v5e
topology: v5e:2x2
jax: 0.10.0
libtpu: 0.0.40
codegen_flags: <defaults>
</compile_context>

<pallas_src>
import functools

import jax
import jax.numpy as jnp
from jax.experimental import pallas as pl
from jax.experimental.pallas import tpu as pltpu

LN_EPS = 1e-5      # PyTorch nn.LayerNorm default
HIDDEN_PAD = 128   # lane-dense padded hidden width


def _round_up(n: int, m: int) -> int:
    return ((n + m - 1) // m) * m


def _cdiv(a: int, b: int) -> int:
    return -(-a // b)


# --------------------------------------------------------------------------- kernel
def toy_model_kernel(x_ref, w1t_ref, w2t_ref, bias_ref, out_ref, *, hidden: int):
    # fc1 + ReLU on the MXU: (TB, in)bf16 @ (in, HP)bf16 -> (TB, HP)f32.
    # Padded w1_t columns are zero, so padded h columns are exactly zero after ReLU.
    h = jnp.maximum(
        jnp.dot(x_ref[...], w1t_ref[...], preferred_element_type=jnp.float32), 0.0
    )

    # LayerNorm statistics over the real `hidden` columns, in f32.
    inv_h = 1.0 / float(hidden)
    mean = jnp.sum(h, axis=-1, keepdims=True) * inv_h          # exact: padded cols = 0
    col = jax.lax.broadcasted_iota(jnp.int32, h.shape, 1)
    centered = jnp.where(col < hidden, h - mean, 0.0)           # mask padded columns
    var = jnp.sum(centered * centered, axis=-1, keepdims=True) * inv_h
    c = centered * jax.lax.rsqrt(var + LN_EPS)                  # affine folded into w2_t

    # fc2 (+ folded LayerNorm affine bias): (TB, HP)bf16 @ (HP, out)bf16 -> (TB, out)f32.
    out_ref[...] = (
        jnp.dot(c.astype(w2t_ref.dtype), w2t_ref[...],
                preferred_element_type=jnp.float32)
        + bias_ref[...]
    ).astype(out_ref.dtype)


# ------------------------------------------------------------------ one-time packing
def pack_toy_model_params(w1, gamma, beta, w2):
    """One-time packing of ToyModel params (call once at setup, not per forward).

    w1:    (hidden, in)   nn.Linear(in, hidden, bias=False).weight
    gamma: (hidden,)      nn.LayerNorm(hidden).weight
    beta:  (hidden,)      nn.LayerNorm(hidden).bias
    w2:    (out, hidden)  nn.Linear(hidden, out, bias=False).weight
    """
    f32 = jnp.float32
    hidden, in_features = w1.shape
    out_features = w2.shape[0]
    gamma = gamma.reshape(-1).astype(f32)
    beta = beta.reshape(-1).astype(f32)

    w1_t = (
        jnp.zeros((in_features, HIDDEN_PAD), f32)
        .at[:, :hidden].set(w1.T.astype(f32))
        .astype(jnp.bfloat16)
    )
    w2_eff = w2.astype(f32) * gamma[None, :]                     # fold LN scale
    w2_t = (
        jnp.zeros((HIDDEN_PAD, out_features), f32)
        .at[:hidden, :].set(w2_eff.T)
        .astype(jnp.bfloat16)
    )
    bias_eff = (beta @ w2.T.astype(f32)).reshape(1, out_features)  # fold LN shift
    return {"w1_t": w1_t, "w2_t": w2_t, "bias": bias_eff, "hidden": hidden}


# ---------------------------------------------------------------------- tiling choice
def _choose_batch_tile(batch: int, max_block_b: int):
    """Return (TB, Bp, nb): row tile, padded batch, grid steps."""
    bp = _round_up(batch, 16)                 # bf16 sublane quantum for the x tile
    if bp <= max_block_b:
        if bp >= 64 and bp % 32 == 0:
            # Keep 2 grid steps so the "parallel" batch axis can use both v7x TCs.
            return bp // 2, bp, 2
        return bp, bp, 1
    nb = _cdiv(bp, max_block_b)
    tb = _round_up(_cdiv(bp, nb), 16)          # balanced tiles, padding < 16*nb rows
    return tb, tb * nb, nb


# -------------------------------------------------------------------------- hot path
@functools.partial(jax.jit, static_argnames=("hidden", "max_block_b"))
def _forward_packed(x, w1_t, w2_t, bias, *, hidden: int, max_block_b: int = 1024):
    B, in_features = x.shape
    HP, out_features = w2_t.shape
    f32 = jnp.float32

    TB, Bp, nb = _choose_batch_tile(B, max_block_b)
    x_p = x.astype(jnp.bfloat16)
    if Bp != B:  # only the small remainder is padded (B already a multiple of 16 -> no pad)
        x_p = jnp.pad(x_p, ((0, Bp - B), (0, 0)))

    flops = 2 * Bp * (in_features * HP + HP * out_features) + 10 * Bp * HP
    bytes_accessed = (
        2 * Bp * in_features        # x (bf16)
        + 2 * in_features * HP      # w1_t (bf16)
        + 2 * HP * out_features     # w2_t (bf16)
        + 4 * out_features          # bias (f32)
        + 4 * Bp * out_features     # out (f32)
    )
    cost = pl.CostEstimate(flops=flops, transcendentals=Bp,
                           bytes_accessed=bytes_accessed)

    vmem = pltpu.MemorySpace.VMEM
    out = pl.pallas_call(
        functools.partial(toy_model_kernel, hidden=hidden),
        out_shape=jax.ShapeDtypeStruct((Bp, out_features), f32),
        grid=(nb,),
        in_specs=[
            pl.BlockSpec((TB, in_features), lambda i: (i, 0), memory_space=vmem),
            pl.BlockSpec((in_features, HP), lambda i: (0, 0), memory_space=vmem),
            pl.BlockSpec((HP, out_features), lambda i: (0, 0), memory_space=vmem),
            pl.BlockSpec((1, out_features), lambda i: (0, 0), memory_space=vmem),
        ],
        out_specs=pl.BlockSpec((TB, out_features), lambda i: (i, 0), memory_space=vmem),
        compiler_params=pltpu.CompilerParams(
            dimension_semantics=("parallel",),
        ),
        cost_estimate=cost,
    )(x_p, w1_t, w2_t, bias)

    if Bp != B:
        out = out[:B]
    return out


def toy_model_forward(x, params, *, max_block_b: int = 1024):
    """x: (B, in_features) -> (B, out_features) using pre-packed `params`."""
    return _forward_packed(
        x, params["w1_t"], params["w2_t"], params["bias"],
        hidden=params["hidden"], max_block_b=max_block_b,
    )


# ------------------------------------------------------------------------- reference
def reference_forward(x, w1, gamma, beta, w2, *, matmul_dtype=jnp.float32):
    """Pure-JAX ToyModel forward.

    matmul_dtype=bf16 mirrors the kernel's MXU precision (bf16 operands, f32 accum),
    with the LN affine folded into fc2 exactly as the kernel does.
    """
    md = matmul_dtype
    f32 = jnp.float32
    h = jnp.maximum(
        jnp.dot(x.astype(md), w1.T.astype(md), preferred_element_type=f32), 0.0
    )
    mean = h.mean(-1, keepdims=True)
    var = ((h - mean) ** 2).mean(-1, keepdims=True)
    hn = (h - mean) * jax.lax.rsqrt(var + LN_EPS)
    w2_eff = w2.astype(f32) * gamma.reshape(1, -1)
    out = jnp.dot(hn.astype(md), w2_eff.T.astype(md), preferred_element_type=f32)
    return out + (beta.astype(f32) @ w2.T.astype(f32)).reshape(1, -1)


if __name__ == "__main__":
    in_features = 32
    out_features = 16
    hidden = 10          # fixed by ToyModel
    batch = 256          # multiple of 16 -> no pad; 2 grid tiles of 128 rows

    key = jax.random.PRNGKey(0)
    kx, kw1, kw2, kg, kb = jax.random.split(key, 5)

    x = jax.random.normal(kx, (batch, in_features), dtype=jnp.float32)
    # nn.Linear layout (out, in), no bias.
    w1 = jax.random.normal(kw1, (hidden, in_features), dtype=jnp.float32) * 0.1
    w2 = jax.random.normal(kw2, (out_features, hidden), dtype=jnp.float32) * 0.1
    # LayerNorm affine params (non-trivial to exercise the folded-affine path).
    gamma = 1.0 + 0.1 * jax.random.normal(kg, (hidden,), dtype=jnp.float32)
    beta = 0.1 * jax.random.normal(kb, (hidden,), dtype=jnp.float32)

    params = pack_toy_model_params(w1, gamma, beta, w2)   # one-time setup
    out = toy_model_forward(x, params)
    out = jax.block_until_ready(out)

    assert out.shape == (batch, out_features)
    # Exactness vs. a reference using the same bf16-operand / f32-accum precision.
    ref_match = reference_forward(x, w1, gamma, beta, w2, matmul_dtype=jnp.bfloat16)
    assert jnp.allclose(out, ref_match, atol=2e-3, rtol=2e-3)
    # Sanity: bf16 drift vs. the full-f32 reference stays small on average.
    ref_f32 = reference_forward(x, w1, gamma, beta, w2, matmul_dtype=jnp.float32)
    assert float(jnp.mean(jnp.abs(out - ref_f32))) < 2e-2

    print("KERNEL_OK")
</pallas_src>

<mosaic_0001>
module attributes {stable_mosaic.version = 11 : i64} {
  func.func @toy_model_kernel(%arg0: i32, %arg1: memref<128x32xbf16, #tpu.memory_space<vmem>>, %arg2: memref<32x128xbf16, #tpu.memory_space<vmem>>, %arg3: memref<128x16xbf16, #tpu.memory_space<vmem>>, %arg4: memref<1x16xf32, #tpu.memory_space<vmem>>, %arg5: memref<128x16xf32, #tpu.memory_space<vmem>>) attributes {dimension_semantics = [#tpu.dimension_semantics<parallel>], iteration_bounds = array<i64: 2>, scalar_prefetch = 0 : i64, scratch_operands = 0 : i64, tpu.core_type = #tpu.core_type<tc>, window_params = [{transform_indices = @transform_0, window_bounds = array<i64: 128, 32>}, {pipeline_mode = #tpu.pipeline_mode<synchronous>, transform_indices = @transform_1, window_bounds = array<i64: 32, 128>}, {pipeline_mode = #tpu.pipeline_mode<synchronous>, transform_indices = @transform_2, window_bounds = array<i64: 128, 16>}, {pipeline_mode = #tpu.pipeline_mode<synchronous>, transform_indices = @transform_3, window_bounds = array<i64: 1, 16>}, {transform_indices = @transform_4, window_bounds = array<i64: 128, 16>}]} {
    %c0 = arith.constant 0 : index
    %c0_0 = arith.constant 0 : index
    %0 = vector.load %arg1[%c0, %c0_0] : memref<128x32xbf16, #tpu.memory_space<vmem>>, vector<128x32xbf16>
    %c0_1 = arith.constant 0 : index
    %c0_2 = arith.constant 0 : index
    %1 = vector.load %arg2[%c0_1, %c0_2] : memref<32x128xbf16, #tpu.memory_space<vmem>>, vector<32x128xbf16>
    %cst = arith.constant dense<0.000000e+00> : vector<128x128xf32>
    %2 = tpu.matmul %0, %1, %cst {dimension_numbers = #tpu.dot_dimension_numbers<[1], [0], [0], [1], [0, 0, 1, 1], [], []>} : vector<128x32xbf16>, vector<32x128xbf16>, vector<128x128xf32> -> vector<128x128xf32>
    %cst_3 = arith.constant 0.000000e+00 : f32
    %3 = vector.broadcast %cst_3 : f32 to vector<128x128xf32>
    %4 = arith.maximumf %2, %3 : vector<128x128xf32>
    %cst_4 = arith.constant dense<0.000000e+00> : vector<128xf32>
    %5 = vector.multi_reduction <add>, %4, %cst_4 [1] : vector<128x128xf32> to vector<128xf32>
    %6 = vector.shape_cast %5 : vector<128xf32> to vector<128x1xf32>
    %cst_5 = arith.constant 1.000000e-01 : f32
    %7 = vector.broadcast %cst_5 : f32 to vector<128x1xf32>
    %8 = arith.mulf %6, %7 : vector<128x1xf32>
    %9 = tpu.iota {dimensions = array<i32: 1>} : vector<128x128xi32>
    %c10_i32 = arith.constant 10 : i32
    %10 = vector.broadcast %c10_i32 : i32 to vector<128x128xi32>
    %11 = arith.cmpi slt, %9, %10 : vector<128x128xi32>
    %12 = vector.broadcast %8 : vector<128x1xf32> to vector<128x128xf32>
    %13 = arith.subf %4, %12 : vector<128x128xf32>
    %cst_6 = arith.constant 0.000000e+00 : f32
    %14 = vector.broadcast %cst_6 : f32 to vector<128x128xf32>
    %15 = arith.select %11, %13, %14 : vector<128x128xi1>, vector<128x128xf32>
    %16 = arith.mulf %15, %15 : vector<128x128xf32>
    %cst_7 = arith.constant dense<0.000000e+00> : vector<128xf32>
    %17 = vector.multi_reduction <add>, %16, %cst_7 [1] : vector<128x128xf32> to vector<128xf32>
    %18 = vector.shape_cast %17 : vector<128xf32> to vector<128x1xf32>
    %cst_8 = arith.constant 1.000000e-01 : f32
    %19 = vector.broadcast %cst_8 : f32 to vector<128x1xf32>
    %20 = arith.mulf %18, %19 : vector<128x1xf32>
    %cst_9 = arith.constant 9.99999974E-6 : f32
    %21 = vector.broadcast %cst_9 : f32 to vector<128x1xf32>
    %22 = arith.addf %20, %21 : vector<128x1xf32>
    %23 = math.rsqrt %22 : vector<128x1xf32>
    %24 = vector.broadcast %23 : vector<128x1xf32> to vector<128x128xf32>
    %25 = arith.mulf %15, %24 : vector<128x128xf32>
    %26 = arith.truncf %25 : vector<128x128xf32> to vector<128x128xbf16>
    %c0_10 = arith.constant 0 : index
    %c0_11 = arith.constant 0 : index
    %27 = vector.load %arg3[%c0_10, %c0_11] : memref<128x16xbf16, #tpu.memory_space<vmem>>, vector<128x16xbf16>
    %cst_12 = arith.constant dense<0.000000e+00> : vector<128x16xf32>
    %28 = tpu.matmul %26, %27, %cst_12 {dimension_numbers = #tpu.dot_dimension_numbers<[1], [0], [0], [1], [0, 0, 1, 1], [], []>} : vector<128x128xbf16>, vector<128x16xbf16>, vector<128x16xf32> -> vector<128x16xf32>
    %c0_13 = arith.constant 0 : index
    %c0_14 = arith.constant 0 : index
    %29 = vector.load %arg4[%c0_13, %c0_14] : memref<1x16xf32, #tpu.memory_space<vmem>>, vector<1x16xf32>
    %30 = vector.broadcast %29 : vector<1x16xf32> to vector<128x16xf32>
    %31 = arith.addf %28, %30 : vector<128x16xf32>
    %c0_15 = arith.constant 0 : index
    %c0_16 = arith.constant 0 : index
    %32 = vector.load %arg5[%c0_15, %c0_16] : memref<128x16xf32, #tpu.memory_space<vmem>>, vector<128x16xf32>
    tpu.vector_store %arg5[%c0_15, %c0_16], %31 {strides = array<i32>} : memref<128x16xf32, #tpu.memory_space<vmem>>, vector<128x16xf32>,
    return
  }
  func.func @transform_0(%arg0: i32) -> (i32, i32) {
    %c0_i32 = arith.constant 0 : i32
    %c0_i32_0 = arith.constant 0 : i32
    return %arg0, %c0_i32 : i32, i32
  }
  func.func @transform_1(%arg0: i32) -> (i32, i32) {
    %c0_i32 = arith.constant 0 : i32
    %c0_i32_0 = arith.constant 0 : i32
    %c0_i32_1 = arith.constant 0 : i32
    return %c0_i32, %c0_i32_0 : i32, i32
  }
  func.func @transform_2(%arg0: i32) -> (i32, i32) {
    %c0_i32 = arith.constant 0 : i32
    %c0_i32_0 = arith.constant 0 : i32
    %c0_i32_1 = arith.constant 0 : i32
    return %c0_i32, %c0_i32_0 : i32, i32
  }
  func.func @transform_3(%arg0: i32) -> (i32, i32) {
    %c0_i32 = arith.constant 0 : i32
    %c0_i32_0 = arith.constant 0 : i32
    %c0_i32_1 = arith.constant 0 : i32
    return %c0_i32, %c0_i32_0 : i32, i32
  }
  func.func @transform_4(%arg0: i32) -> (i32, i32) {
    %c0_i32 = arith.constant 0 : i32
    %c0_i32_0 = arith.constant 0 : i32
    return %arg0, %c0_i32 : i32, i32
  }
}

</mosaic_0001>

<llo_original>
// kernel: _forward_packed.1
$region0: #{_forward_packed.1}
  #allocation0 [shape = 'u32[]', space=smem, size = 0x4, offset = 0x4, fixed_abs, tag = 'smem constant byte address 0x4 - core index']
  #allocation1 [shape = 'u32[72,128]{1,0:T(1,128)}', space=vmem, size = 0x9000, scoped, tag = 'internal scratch']
  %s0 = inlined_call_operand.vmem [shape: bf16[256,32], index: 0, kind: input, shape index: {}]
  %s1 = inlined_call_operand.vmem [shape: bf16[32,128], index: 1, kind: input, shape index: {}]
  %s2 = inlined_call_operand.vmem [shape: bf16[128,16], index: 2, kind: input, shape index: {}]
  %s3 = inlined_call_operand.vmem [shape: f32[1,16], index: 3, kind: input, shape index: {}]
  %s4 = inlined_call_operand.vmem [shape: f32[256,16], index: 4, kind: output, shape index: {}]
  %s5 = sld [smem:[#allocation0]]
  $region49: #{_forward_packed.1} parent=0
    _
  %s7 = ssub.s32 1, %s5
  %s8 = scalar_select 0, %s7, %s5
  loop: start=0, step=1, limit=4
  $region2: #{_forward_packed.1} parent=0 // loop_pre_header
    _
  $region3: #{_forward_packed.1} parent=0 // loop_header
    %s10 = sphi 0, %s14
    %p11 = scmp.ge.s32.totalorder %s10, 4
    %s20 = sphi 0, %s22
    %s23 = sphi 0, %s20
    %s24 = sphi 0, %s23
    %s40 = sphi 0, %s24
    %s44 = sphi 0, %s44
    %s46 = sphi 0, %s44
    %s47 = sphi 0, %s46
    %s61 = sphi 0, %s47
    %s65 = sphi 0, %s65
    %s67 = sphi 0, %s65
    %s68 = sphi 0, %s67
    %s82 = sphi 0, %s68
    %s86 = sphi 0, %s86
    %s88 = sphi 0, %s86
    %s89 = sphi 0, %s88
    %s103 = sphi 0, %s89
    %s109 = sphi 0, %s111
    %s112 = sphi 0, %s109
    %s113 = sphi 0, %s112
    %s129 = sphi 0, %s113
  $region4: #{_forward_packed.1} parent=0 // loop_header_branch
    %13 = sbr.rel (%p11) target = $region8
  $region5: #{_forward_packed.1} parent=0 // loop_body
    %s15 = ssub.s32 %s10, 1
    %s16 = ssub.s32 %s10, 2
    %s17 = sadd.s32 %s10, 1
    %s18 = ssub.s32 %s10, %s17
    %p19 = scmp.eq.s32.totalorder %s18, 0
    %s21 = sadd.s32 %s20, 1
    %s22 = scalar_select %p19, %s20, %s21
    %p25 = pneg %p19
    %p26 = scmp.eq.s32.totalorder %s10, 1
    %p27 = por %p25, %p26
    %p28 = scmp.ne.s32.totalorder %s20, %s23
    %p29 = scmp.eq.s32.totalorder %s10, 0
    %p30 = por %p28, %p29
    %p31 = scmp.ne.s32.totalorder %s20, %s23
    %p32 = scmp.eq.s32.totalorder %s15, 1
    %p33 = por %p31, %p32
    %p34 = scmp.ne.s32.totalorder %s23, %s24
    %p35 = scmp.eq.s32.totalorder %s15, 0
    %p36 = por %p34, %p35
    %p37 = scmp.ne.s32.totalorder %s23, %s24
    %p38 = scmp.eq.s32.totalorder %s16, 1
    %p39 = por %p37, %p38
    %p41 = scmp.ne.s32.totalorder %s24, %s40
    %p42 = scmp.eq.s32.totalorder %s16, 0
    %p43 = por %p41, %p42
    %s45 = sadd.s32 %s44, 1
    %p48 = scmp.eq.s32.totalorder %s10, 1
    %p49 = scmp.ne.s32.totalorder %s44, %s46
    %p50 = scmp.eq.s32.totalorder %s10, 0
    %p51 = por %p49, %p50
    %p52 = scmp.ne.s32.totalorder %s44, %s46
    %p53 = scmp.eq.s32.totalorder %s15, 1
    %p54 = por %p52, %p53
    %p55 = scmp.ne.s32.totalorder %s46, %s47
    %p56 = scmp.eq.s32.totalorder %s15, 0
    %p57 = por %p55, %p56
    %p58 = scmp.ne.s32.totalorder %s46, %s47
    %p59 = scmp.eq.s32.totalorder %s16, 1
    %p60 = por %p58, %p59
    %p62 = scmp.ne.s32.totalorder %s47, %s61
    %p63 = scmp.eq.s32.totalorder %s16, 0
    %p64 = por %p62, %p63
    %s66 = sadd.s32 %s65, 1
    %p69 = scmp.eq.s32.totalorder %s10, 1
    %p70 = scmp.ne.s32.totalorder %s65, %s67
    %p71 = scmp.eq.s32.totalorder %s10, 0
    %p72 = por %p70, %p71
    %p73 = scmp.ne.s32.totalorder %s65, %s67
    %p74 = scmp.eq.s32.totalorder %s15, 1
    %p75 = por %p73, %p74
    %p76 = scmp.ne.s32.totalorder %s67, %s68
    %p77 = scmp.eq.s32.totalorder %s15, 0
    %p78 = por %p76, %p77
    %p79 = scmp.ne.s32.totalorder %s67, %s68
    %p80 = scmp.eq.s32.totalorder %s16, 1
    %p81 = por %p79, %p80
    %p83 = scmp.ne.s32.totalorder %s68, %s82
    %p84 = scmp.eq.s32.totalorder %s16, 0
    %p85 = por %p83, %p84
    %s87 = sadd.s32 %s86, 1
    %p90 = scmp.eq.s32.totalorder %s10, 1
    %p91 = scmp.ne.s32.totalorder %s86, %s88
    %p92 = scmp.eq.s32.totalorder %s10, 0
    %p93 = por %p91, %p92
    %p94 = scmp.ne.s32.totalorder %s86, %s88
    %p95 = scmp.eq.s32.totalorder %s15, 1
    %p96 = por %p94, %p95
    %p97 = scmp.ne.s32.totalorder %s88, %s89
    %p98 = scmp.eq.s32.totalorder %s15, 0
    %p99 = por %p97, %p98
    %p100 = scmp.ne.s32.totalorder %s88, %s89
    %p101 = scmp.eq.s32.totalorder %s16, 1
    %p102 = por %p100, %p101
    %p104 = scmp.ne.s32.totalorder %s89, %s103
    %p105 = scmp.eq.s32.totalorder %s16, 0
    %p106 = por %p104, %p105
    %s107 = ssub.s32 %s10, %s17
    %p108 = scmp.eq.s32.totalorder %s107, 0
    %s110 = sadd.s32 %s109, 1
    %s111 = scalar_select %p108, %s109, %s110
    %p114 = pneg %p108
    %p115 = scmp.eq.s32.totalorder %s10, 1
    %p116 = por %p114, %p115
    %p117 = scmp.ne.s32.totalorder %s109, %s112
    %p118 = scmp.eq.s32.totalorder %s10, 0
    %p119 = por %p117, %p118
    %p120 = scmp.ne.s32.totalorder %s109, %s112
    %p121 = scmp.eq.s32.totalorder %s15, 1
    %p122 = por %p120, %p121
    %p123 = scmp.ne.s32.totalorder %s112, %s113
    %p124 = scmp.eq.s32.totalorder %s15, 0
    %p125 = por %p123, %p124
    %p126 = scmp.ne.s32.totalorder %s112, %s113
    %p127 = scmp.eq.s32.totalorder %s16, 1
    %p128 = por %p126, %p127
    %p130 = scmp.ne.s32.totalorder %s113, %s129
    %p131 = scmp.eq.s32.totalorder %s16, 0
    %p132 = por %p130, %p131
    %p133 = scmp.le.s32.totalorder 1, %s10
    %p134 = scmp.lt.s32.totalorder %s10, 3
    %p135 = pnand %p133, %p134
    %p136 = pneg %p135
    // Predicated region
    $region9: #{_forward_packed.1} parent=5 // pred_check
      _
    $region10: #{_forward_packed.1} parent=5 // pred_check_branch
      %138 = sbr.rel (%p135) target = $region12
    $region11: #{_forward_packed.1} parent=5 // pred_region
      %s139 = ssub.s32 %s10, 1
      // Predicated region
      $region13: #{_forward_packed.1} parent=11 // pred_check
        %p140 = pneg %p57
      $region14: #{_forward_packed.1} parent=11 // pred_check_branch
        %142 = sbr.rel (%p140) target = $region16
      $region15: #{_forward_packed.1} parent=11 // pred_region
        _
      $region16: #{_forward_packed.1} parent=11 // pred_fallthru
        _
      // Predicated region
      $region17: #{_forward_packed.1} parent=11 // pred_check
        %p143 = pneg %p78
      $region18: #{_forward_packed.1} parent=11 // pred_check_branch
        %145 = sbr.rel (%p143) target = $region20
      $region19: #{_forward_packed.1} parent=11 // pred_region
        _
      $region20: #{_forward_packed.1} parent=11 // pred_fallthru
        _
      // Predicated region
      $region21: #{_forward_packed.1} parent=11 // pred_check
        %p146 = pneg %p99
      $region22: #{_forward_packed.1} parent=11 // pred_check_branch
        %148 = sbr.rel (%p146) target = $region24
      $region23: #{_forward_packed.1} parent=11 // pred_region
        _
      $region24: #{_forward_packed.1} parent=11 // pred_fallthru
        _
    $region12: #{_forward_packed.1} parent=5 // pred_fallthru
      _
    %p149 = scmp.lt.s32.totalorder %s10, 2
    // Predicated region
    $region25: #{_forward_packed.1} parent=5 // pred_check
      %p150 = pneg %p149
    $region26: #{_forward_packed.1} parent=5 // pred_check_branch
      %152 = sbr.rel (%p150) target = $region28
    $region27: #{_forward_packed.1} parent=5 // pred_region
      // Predicated region
      $region29: #{_forward_packed.1} parent=27 // pred_check
        %p153 = pneg %p30
      $region30: #{_forward_packed.1} parent=27 // pred_check_branch
        %155 = sbr.rel (%p153) target = $region32
      $region31: #{_forward_packed.1} parent=27 // pred_region
        %s156 = smul.u32 16, %s10
        %p157 = scmp.lt.s32.totalorder %s156, 31
        %s158 = scalar_select %p157, %s156, 31
        %s159 = smul.addr %s158, 4
        %s160 = scalar_lea.vmem %s0, %s159
        %s161 = smul.u32 16, %s10
      $region32: #{_forward_packed.1} parent=27 // pred_fallthru
        _
    $region28: #{_forward_packed.1} parent=5 // pred_fallthru
      _
    %p162 = scmp.le.s32.totalorder 1, %s10
    %p163 = scmp.lt.s32.totalorder %s10, 3
    %p164 = pnand %p162, %p163
    %p165 = pneg %p164
    // Predicated region
    $region33: #{_forward_packed.1} parent=5 // pred_check
      _
    $region34: #{_forward_packed.1} parent=5 // pred_check_branch
      %167 = sbr.rel (%p164) target = $region36
    $region35: #{_forward_packed.1} parent=5 // pred_region
      %s168 = ssub.s32 %s10, 1
      %s169 = smul.u32 16, %s15
      %p170 = scmp.lt.s32.totalorder %s169, 31
      %s171 = scalar_select %p170, %s169, 31
      %s172 = smul.addr %s171, 4
      %s173 = scalar_lea.vmem %s0, %s172
      %p174 = pneg %p36
      %p175 = pneg %p33
      %p176 = pneg %p57
      %p177 = pneg %p54
      %p178 = pneg %p78
      %p179 = pneg %p75
      %p180 = pneg %p99
      %p181 = pneg %p96
      %p182 = pneg %p125
      %p183 = pneg %p122
      %s184 = smul.u32 16, %s15
      %p185 = scmp.lt.s32.totalorder %s184, 31
      %s186 = scalar_select %p185, %s184, 31
      %s187 = smul.addr %s186, 8
      %s188 = scalar_lea.vmem %s4, %s187
      %s189 = smul.u32 16, %s15
      %p190 = scmp.lt.s32.totalorder %s189, 31
      %s191 = scalar_select %p190, %s189, 31
      %s192 = smul.addr %s191, 4
      %s193 = scalar_lea.vmem %s0, %s192
      %s194 = smul.u32 16, %s15
      %s195 = smul.u32 16, %s15
      %p196 = scmp.lt.s32.totalorder %s195, 31
      %s197 = scalar_select %p196, %s195, 31
      %s198 = smul.addr %s197, 8
      %s199 = scalar_lea.vmem %s4, %s198
      %s200 = smul.u32 16, %s15
      %v202 = vld [vmem:[%s193] sm:$0xf]
      %v203 = vld [vmem:[%s193 + $0x4] sm:$0xf]
      %v204 = vld [vmem:[%s193 + $0x8] sm:$0xf]
      %v205 = vld [vmem:[%s193 + $0xc] sm:$0xf]
      %v206 = vld [vmem:[%s193 + $0x10] sm:$0xf]
      %v207 = vld [vmem:[%s193 + $0x14] sm:$0xf]
      %v208 = vld [vmem:[%s193 + $0x18] sm:$0xf]
      %v209 = vld [vmem:[%s193 + $0x1c] sm:$0xf]
      %v210 = vld [vmem:[%s193 + $0x20] sm:$0xf]
      %v211 = vld [vmem:[%s193 + $0x24] sm:$0xf]
      %v212 = vld [vmem:[%s193 + $0x28] sm:$0xf]
      %v213 = vld [vmem:[%s193 + $0x2c] sm:$0xf]
      %v214 = vld [vmem:[%s193 + $0x30] sm:$0xf]
      %v215 = vld [vmem:[%s193 + $0x34] sm:$0xf]
      %v216 = vld [vmem:[%s193 + $0x38] sm:$0xf]
      %v217 = vld [vmem:[%s193 + $0x3c] sm:$0xf]
      %v218 = vld [vmem:[%s1] sm:$0xf]
      %v219 = vld [vmem:[%s1 + $0x4] sm:$0xf]
      %v220 = vld [vmem:[%s1 + $0x8] sm:$0xf]
      %v221 = vld [vmem:[%s1 + $0xc] sm:$0xf]
      %v238 = vunpack.c.l.b16 %v202
      %v239 = vunpack.c.l.b16 %v203
      %v240 = vunpack.c.l.b16 %v204
      %v241 = vunpack.c.l.b16 %v205
      %v242 = vunpack.c.l.b16 %v206
      %v243 = vunpack.c.l.b16 %v207
      %v244 = vunpack.c.l.b16 %v208
      %v245 = vunpack.c.l.b16 %v209
      %v246 = vunpack.c.l.b16 %v210
      %v247 = vunpack.c.l.b16 %v211
      %v248 = vunpack.c.l.b16 %v212
      %v249 = vunpack.c.l.b16 %v213
      %v250 = vunpack.c.l.b16 %v214
      %v251 = vunpack.c.l.b16 %v215
      %v252 = vunpack.c.l.b16 %v216
      %v253 = vunpack.c.l.b16 %v217
      %v254 = vpack.c.b16 %v239, %v238
      %v255 = vpack.c.b16 %v241, %v240
      %v256 = vpack.c.b16 %v243, %v242
      %v257 = vpack.c.b16 %v245, %v244
      %v258 = vpack.c.b16 %v247, %v246
      %v259 = vpack.c.b16 %v249, %v248
      %v260 = vpack.c.b16 %v251, %v250
      %v261 = vpack.c.b16 %v253, %v252
      %v266 = vunpack.c.l.b16 %v218
      %v267 = vunpack.c.l.b16 %v219
      %v268 = vunpack.c.l.b16 %v220
      %v269 = vunpack.c.l.b16 %v221
      %v270 = vpack.c.b16 %v267, %v266
      %v271 = vpack.c.b16 %v269, %v268
      %vm274 = vcmask 261120
      %v276 = vsel %vm274, %v254, 0
      %v279 = vsel %vm274, %v255, 0
      %v282 = vsel %vm274, %v256, 0
      %v285 = vsel %vm274, %v257, 0
      %v288 = vsel %vm274, %v258, 0
      %v291 = vsel %vm274, %v259, 0
      %v294 = vsel %vm274, %v260, 0
      %v297 = vsel %vm274, %v261, 0
      %299 = vmatpush.bf16.msra.mxu0 0
      %300 = vmatpush.bf16.msra.mxu0 0
      %301 = vmatpush.bf16.msra.mxu0 0
      %302 = vmatpush.bf16.msra.mxu0 0
      %303 = vmatpush.bf16.msra.mxu0 0
      %304 = vmatpush.bf16.msra.mxu0 0
      %305 = vmatpush.bf16.msra.mxu0 %v271
      %306 = vmatpush.bf16.msra.mxu0 %v270
      %307 = vmatmul.bf16.gmra.mxu0 %v276
      %v308 = vpop.f32.mrf.mxu0
      %v309 = vadd.f32 0.0, %v308
      %v310 = vpop.f32.mrf.mxu0
      %v311 = vadd.f32 0.0, %v310
      %312 = vmatmul.bf16.gmra.mxu0 %v279
      %v313 = vpop.f32.mrf.mxu0
      %v314 = vadd.f32 0.0, %v313
      %v315 = vpop.f32.mrf.mxu0
      %v316 = vadd.f32 0.0, %v315
      %317 = vmatmul.bf16.gmra.mxu0 %v282
      %v318 = vpop.f32.mrf.mxu0
      %v319 = vadd.f32 0.0, %v318
      %v320 = vpop.f32.mrf.mxu0
      %v321 = vadd.f32 0.0, %v320
      %322 = vmatmul.bf16.gmra.mxu0 %v285
      %v323 = vpop.f32.mrf.mxu0
      %v324 = vadd.f32 0.0, %v323
      %v325 = vpop.f32.mrf.mxu0
      %v326 = vadd.f32 0.0, %v325
      %327 = vmatmul.bf16.gmra.mxu0 %v288
      %v328 = vpop.f32.mrf.mxu0
      %v329 = vadd.f32 0.0, %v328
      %v330 = vpop.f32.mrf.mxu0
      %v331 = vadd.f32 0.0, %v330
      %332 = vmatmul.bf16.gmra.mxu0 %v291
      %v333 = vpop.f32.mrf.mxu0
      %v334 = vadd.f32 0.0, %v333
      %v335 = vpop.f32.mrf.mxu0
      %v336 = vadd.f32 0.0, %v335
      %337 = vmatmul.bf16.gmra.mxu0 %v294
      %v338 = vpop.f32.mrf.mxu0
      %v339 = vadd.f32 0.0, %v338
      %v340 = vpop.f32.mrf.mxu0
      %v341 = vadd.f32 0.0, %v340
      %342 = vmatmul.bf16.gmra.mxu0 %v297
      %v343 = vpop.f32.mrf.mxu0
      %v344 = vadd.f32 0.0, %v343
      %v345 = vpop.f32.mrf.mxu0
      %v346 = vadd.f32 0.0, %v345
      %347 = vdwg.mxu0
      %v348 = vmax.f32 %v309, 0.0
      %v349 = vmax.f32 %v311, 0.0
      %v350 = vmax.f32 %v314, 0.0
      %v351 = vmax.f32 %v316, 0.0
      %v352 = vmax.f32 %v319, 0.0
      %v353 = vmax.f32 %v321, 0.0
      %v354 = vmax.f32 %v324, 0.0
      %v355 = vmax.f32 %v326, 0.0
      %v356 = vmax.f32 %v329, 0.0
      %v357 = vmax.f32 %v331, 0.0
      %v358 = vmax.f32 %v334, 0.0
      %v359 = vmax.f32 %v336, 0.0
      %v360 = vmax.f32 %v339, 0.0
      %v361 = vmax.f32 %v341, 0.0
      %v362 = vmax.f32 %v344, 0.0
      %v363 = vmax.f32 %v346, 0.0
      %364 = vadd.xlane.f32.xlu0 %v348
      %v365 = vpop.xlane.xlu0 %364
      %366 = vadd.xlane.f32.xlu0 %v349
      %v367 = vpop.xlane.xlu0 %366
      %368 = vadd.xlane.f32.xlu0 %v350
      %v369 = vpop.xlane.xlu0 %368
      %370 = vadd.xlane.f32.xlu0 %v351
      %v371 = vpop.xlane.xlu0 %370
      %372 = vadd.xlane.f32.xlu0 %v352
      %v373 = vpop.xlane.xlu0 %372
      %374 = vadd.xlane.f32.xlu0 %v353
      %v375 = vpop.xlane.xlu0 %374
      %376 = vadd.xlane.f32.xlu0 %v354
      %v377 = vpop.xlane.xlu0 %376
      %378 = vadd.xlane.f32.xlu0 %v355
      %v379 = vpop.xlane.xlu0 %378
      %380 = vadd.xlane.f32.xlu0 %v356
      %v381 = vpop.xlane.xlu0 %380
      %382 = vadd.xlane.f32.xlu0 %v357
      %v383 = vpop.xlane.xlu0 %382
      %384 = vadd.xlane.f32.xlu0 %v358
      %v385 = vpop.xlane.xlu0 %384
      %386 = vadd.xlane.f32.xlu0 %v359
      %v387 = vpop.xlane.xlu0 %386
      %388 = vadd.xlane.f32.xlu0 %v360
      %v389 = vpop.xlane.xlu0 %388
      %390 = vadd.xlane.f32.xlu0 %v361
      %v391 = vpop.xlane.xlu0 %390
      %392 = vadd.xlane.f32.xlu0 %v362
      %v393 = vpop.xlane.xlu0 %392
      %394 = vadd.xlane.f32.xlu0 %v363
      %v395 = vpop.xlane.xlu0 %394
      %v396 = vmul.f32 %v365, 0.1
      %v397 = vmul.f32 %v367, 0.1
      %v398 = vmul.f32 %v369, 0.1
      %v399 = vmul.f32 %v371, 0.1
      %v400 = vmul.f32 %v373, 0.1
      %v401 = vmul.f32 %v375, 0.1
      %v402 = vmul.f32 %v377, 0.1
      %v403 = vmul.f32 %v379, 0.1
      %v404 = vmul.f32 %v381, 0.1
      %v405 = vmul.f32 %v383, 0.1
      %v406 = vmul.f32 %v385, 0.1
      %v407 = vmul.f32 %v387, 0.1
      %v408 = vmul.f32 %v389, 0.1
      %v409 = vmul.f32 %v391, 0.1
      %v410 = vmul.f32 %v393, 0.1
      %v411 = vmul.f32 %v395, 0.1
      %v412 = vlaneseq
      %v413 = vand.u32 %v412, 127
      %vm414 = vcmp.lt.s32.totalorder %v413, 10
      %v415 = vsub.f32 %v348, %v396
      %v416 = vsub.f32 %v349, %v397
      %v417 = vsub.f32 %v350, %v398
      %v418 = vsub.f32 %v351, %v399
      %v419 = vsub.f32 %v352, %v400
      %v420 = vsub.f32 %v353, %v401
      %v421 = vsub.f32 %v354, %v402
      %v422 = vsub.f32 %v355, %v403
      %v423 = vsub.f32 %v356, %v404
      %v424 = vsub.f32 %v357, %v405
      %v425 = vsub.f32 %v358, %v406
      %v426 = vsub.f32 %v359, %v407
      %v427 = vsub.f32 %v360, %v408
      %v428 = vsub.f32 %v361, %v409
      %v429 = vsub.f32 %v362, %v410
      %v430 = vsub.f32 %v363, %v411
      %v431 = vsel %vm414, %v415, 0.0
      %v432 = vsel %vm414, %v416, 0.0
      %v433 = vsel %vm414, %v417, 0.0
      %v434 = vsel %vm414, %v418, 0.0
      %v435 = vsel %vm414, %v419, 0.0
      %v436 = vsel %vm414, %v420, 0.0
      %v437 = vsel %vm414, %v421, 0.0
      %v438 = vsel %vm414, %v422, 0.0
      %v439 = vsel %vm414, %v423, 0.0
      %v440 = vsel %vm414, %v424, 0.0
      %v441 = vsel %vm414, %v425, 0.0
      %v442 = vsel %vm414, %v426, 0.0
      %v443 = vsel %vm414, %v427, 0.0
      %v444 = vsel %vm414, %v428, 0.0
      %v445 = vsel %vm414, %v429, 0.0
      %v446 = vsel %vm414, %v430, 0.0
      %v447 = vmul.f32 %v431, %v431
      %v448 = vmul.f32 %v432, %v432
      %v449 = vmul.f32 %v433, %v433
      %v450 = vmul.f32 %v434, %v434
      %v451 = vmul.f32 %v435, %v435
      %v452 = vmul.f32 %v436, %v436
      %v453 = vmul.f32 %v437, %v437
      %v454 = vmul.f32 %v438, %v438
      %v455 = vmul.f32 %v439, %v439
      %v456 = vmul.f32 %v440, %v440
      %v457 = vmul.f32 %v441, %v441
      %v458 = vmul.f32 %v442, %v442
      %v459 = vmul.f32 %v443, %v443
      %v460 = vmul.f32 %v444, %v444
      %v461 = vmul.f32 %v445, %v445
      %v462 = vmul.f32 %v446, %v446
      %463 = vadd.xlane.f32.xlu0 %v447
      %v464 = vpop.xlane.xlu0 %463
      %465 = vadd.xlane.f32.xlu0 %v448
      %v466 = vpop.xlane.xlu0 %465
      %467 = vadd.xlane.f32.xlu0 %v449
      %v468 = vpop.xlane.xlu0 %467
      %469 = vadd.xlane.f32.xlu0 %v450
      %v470 = vpop.xlane.xlu0 %469
      %471 = vadd.xlane.f32.xlu0 %v451
      %v472 = vpop.xlane.xlu0 %471
      %473 = vadd.xlane.f32.xlu0 %v452
      %v474 = vpop.xlane.xlu0 %473
      %475 = vadd.xlane.f32.xlu0 %v453
      %v476 = vpop.xlane.xlu0 %475
      %477 = vadd.xlane.f32.xlu0 %v454
      %v478 = vpop.xlane.xlu0 %477
      %479 = vadd.xlane.f32.xlu0 %v455
      %v480 = vpop.xlane.xlu0 %479
      %481 = vadd.xlane.f32.xlu0 %v456
      %v482 = vpop.xlane.xlu0 %481
      %483 = vadd.xlane.f32.xlu0 %v457
      %v484 = vpop.xlane.xlu0 %483
      %485 = vadd.xlane.f32.xlu0 %v458
      %v486 = vpop.xlane.xlu0 %485
      %487 = vadd.xlane.f32.xlu0 %v459
      %v488 = vpop.xlane.xlu0 %487
      %489 = vadd.xlane.f32.xlu0 %v460
      %v490 = vpop.xlane.xlu0 %489
      %491 = vadd.xlane.f32.xlu0 %v461
      %v492 = vpop.xlane.xlu0 %491
      %493 = vadd.xlane.f32.xlu0 %v462
      %v494 = vpop.xlane.xlu0 %493
      %v495 = vmul.f32 %v464, 0.1
      %v496 = vmul.f32 %v466, 0.1
      %v497 = vmul.f32 %v468, 0.1
      %v498 = vmul.f32 %v470, 0.1
      %v499 = vmul.f32 %v472, 0.1
      %v500 = vmul.f32 %v474, 0.1
      %v501 = vmul.f32 %v476, 0.1
      %v502 = vmul.f32 %v478, 0.1
      %v503 = vmul.f32 %v480, 0.1
      %v504 = vmul.f32 %v482, 0.1
      %v505 = vmul.f32 %v484, 0.1
      %v506 = vmul.f32 %v486, 0.1
      %v507 = vmul.f32 %v488, 0.1
      %v508 = vmul.f32 %v490, 0.1
      %v509 = vmul.f32 %v492, 0.1
      %v510 = vmul.f32 %v494, 0.1
      %v511 = vadd.f32 %v495, 1e-05
      %v512 = vadd.f32 %v496, 1e-05
      %v513 = vadd.f32 %v497, 1e-05
      %v514 = vadd.f32 %v498, 1e-05
      %v515 = vadd.f32 %v499, 1e-05
      %v516 = vadd.f32 %v500, 1e-05
      %v517 = vadd.f32 %v501, 1e-05
      %v518 = vadd.f32 %v502, 1e-05
      %v519 = vadd.f32 %v503, 1e-05
      %v520 = vadd.f32 %v504, 1e-05
      %v521 = vadd.f32 %v505, 1e-05
      %v522 = vadd.f32 %v506, 1e-05
      %v523 = vadd.f32 %v507, 1e-05
      %v524 = vadd.f32 %v508, 1e-05
      %v525 = vadd.f32 %v509, 1e-05
      %v526 = vadd.f32 %v510, 1e-05
      %v527 = vrsqrt.pop %v511
      %v528 = vmul.f32 %v527, %v511
      %v529 = vmul.f32 %v528, %v527
      %v530 = vmul.f32 0.5, %v529
      %v531 = vsub.f32 1.5, %v530
      %v532 = vmul.f32 %v527, %v531
      %vm533 = vweird.f32 %v511
      %vm534 = vweird.f32 %v527
      %vm535 = vmor %vm533, %vm534
      %v536 = vsel %vm535, %v527, %v532
      %v537 = vrsqrt.pop %v512
      %v538 = vmul.f32 %v537, %v512
      %v539 = vmul.f32 %v538, %v537
      %v540 = vmul.f32 0.5, %v539
      %v541 = vsub.f32 1.5, %v540
      %v542 = vmul.f32 %v537, %v541
      %vm543 = vweird.f32 %v512
      %vm544 = vweird.f32 %v537
      %vm545 = vmor %vm543, %vm544
      %v546 = vsel %vm545, %v537, %v542
      %v547 = vrsqrt.pop %v513
      %v548 = vmul.f32 %v547, %v513
      %v549 = vmul.f32 %v548, %v547
      %v550 = vmul.f32 0.5, %v549
      %v551 = vsub.f32 1.5, %v550
      %v552 = vmul.f32 %v547, %v551
      %vm553 = vweird.f32 %v513
      %vm554 = vweird.f32 %v547
      %vm555 = vmor %vm553, %vm554
      %v556 = vsel %vm555, %v547, %v552
      %v557 = vrsqrt.pop %v514
      %v558 = vmul.f32 %v557, %v514
      %v559 = vmul.f32 %v558, %v557
      %v560 = vmul.f32 0.5, %v559
      %v561 = vsub.f32 1.5, %v560
      %v562 = vmul.f32 %v557, %v561
      %vm563 = vweird.f32 %v514
      %vm564 = vweird.f32 %v557
      %vm565 = vmor %vm563, %vm564
      %v566 = vsel %vm565, %v557, %v562
      %v567 = vrsqrt.pop %v515
      %v568 = vmul.f32 %v567, %v515
      %v569 = vmul.f32 %v568, %v567
      %v570 = vmul.f32 0.5, %v569
      %v571 = vsub.f32 1.5, %v570
      %v572 = vmul.f32 %v567, %v571
      %vm573 = vweird.f32 %v515
      %vm574 = vweird.f32 %v567
      %vm575 = vmor %vm573, %vm574
      %v576 = vsel %vm575, %v567, %v572
      %v577 = vrsqrt.pop %v516
      %v578 = vmul.f32 %v577, %v516
      %v579 = vmul.f32 %v578, %v577
      %v580 = vmul.f32 0.5, %v579
      %v581 = vsub.f32 1.5, %v580
      %v582 = vmul.f32 %v577, %v581
      %vm583 = vweird.f32 %v516
      %vm584 = vweird.f32 %v577
      %vm585 = vmor %vm583, %vm584
      %v586 = vsel %vm585, %v577, %v582
      %v587 = vrsqrt.pop %v517
      %v588 = vmul.f32 %v587, %v517
      %v589 = vmul.f32 %v588, %v587
      %v590 = vmul.f32 0.5, %v589
      %v591 = vsub.f32 1.5, %v590
      %v592 = vmul.f32 %v587, %v591
      %vm593 = vweird.f32 %v517
      %vm594 = vweird.f32 %v587
      %vm595 = vmor %vm593, %vm594
      %v596 = vsel %vm595, %v587, %v592
      %v597 = vrsqrt.pop %v518
      %v598 = vmul.f32 %v597, %v518
      %v599 = vmul.f32 %v598, %v597
      %v600 = vmul.f32 0.5, %v599
      %v601 = vsub.f32 1.5, %v600
      %v602 = vmul.f32 %v597, %v601
      %vm603 = vweird.f32 %v518
      %vm604 = vweird.f32 %v597
      %vm605 = vmor %vm603, %vm604
      %v606 = vsel %vm605, %v597, %v602
      %v607 = vrsqrt.pop %v519
      %v608 = vmul.f32 %v607, %v519
      %v609 = vmul.f32 %v608, %v607
      %v610 = vmul.f32 0.5, %v609
      %v611 = vsub.f32 1.5, %v610
      %v612 = vmul.f32 %v607, %v611
      %vm613 = vweird.f32 %v519
      %vm614 = vweird.f32 %v607
      %vm615 = vmor %vm613, %vm614
      %v616 = vsel %vm615, %v607, %v612
      %v617 = vrsqrt.pop %v520
      %v618 = vmul.f32 %v617, %v520
      %v619 = vmul.f32 %v618, %v617
      %v620 = vmul.f32 0.5, %v619
      %v621 = vsub.f32 1.5, %v620
      %v622 = vmul.f32 %v617, %v621
      %vm623 = vweird.f32 %v520
      %vm624 = vweird.f32 %v617
      %vm625 = vmor %vm623, %vm624
      %v626 = vsel %vm625, %v617, %v622
      %v627 = vrsqrt.pop %v521
      %v628 = vmul.f32 %v627, %v521
      %v629 = vmul.f32 %v628, %v627
      %v630 = vmul.f32 0.5, %v629
      %v631 = vsub.f32 1.5, %v630
      %v632 = vmul.f32 %v627, %v631
      %vm633 = vweird.f32 %v521
      %vm634 = vweird.f32 %v627
      %vm635 = vmor %vm633, %vm634
      %v636 = vsel %vm635, %v627, %v632
      %v637 = vrsqrt.pop %v522
      %v638 = vmul.f32 %v637, %v522
      %v639 = vmul.f32 %v638, %v637
      %v640 = vmul.f32 0.5, %v639
      %v641 = vsub.f32 1.5, %v640
      %v642 = vmul.f32 %v637, %v641
      %vm643 = vweird.f32 %v522
      %vm644 = vweird.f32 %v637
      %vm645 = vmor %vm643, %vm644
      %v646 = vsel %vm645, %v637, %v642
      %v647 = vrsqrt.pop %v523
      %v648 = vmul.f32 %v647, %v523
      %v649 = vmul.f32 %v648, %v647
      %v650 = vmul.f32 0.5, %v649
      %v651 = vsub.f32 1.5, %v650
      %v652 = vmul.f32 %v647, %v651
      %vm653 = vweird.f32 %v523
      %vm654 = vweird.f32 %v647
      %vm655 = vmor %vm653, %vm654
      %v656 = vsel %vm655, %v647, %v652
      %v657 = vrsqrt.pop %v524
      %v658 = vmul.f32 %v657, %v524
      %v659 = vmul.f32 %v658, %v657
      %v660 = vmul.f32 0.5, %v659
      %v661 = vsub.f32 1.5, %v660
      %v662 = vmul.f32 %v657, %v661
      %vm663 = vweird.f32 %v524
      %vm664 = vweird.f32 %v657
      %vm665 = vmor %vm663, %vm664
      %v666 = vsel %vm665, %v657, %v662
      %v667 = vrsqrt.pop %v525
      %v668 = vmul.f32 %v667, %v525
      %v669 = vmul.f32 %v668, %v667
      %v670 = vmul.f32 0.5, %v669
      %v671 = vsub.f32 1.5, %v670
      %v672 = vmul.f32 %v667, %v671
      %vm673 = vweird.f32 %v525
      %vm674 = vweird.f32 %v667
      %vm675 = vmor %vm673, %vm674
      %v676 = vsel %vm675, %v667, %v672
      %v677 = vrsqrt.pop %v526
      %v678 = vmul.f32 %v677, %v526
      %v679 = vmul.f32 %v678, %v677
      %v680 = vmul.f32 0.5, %v679
      %v681 = vsub.f32 1.5, %v680
      %v682 = vmul.f32 %v677, %v681
      %vm683 = vweird.f32 %v526
      %vm684 = vweird.f32 %v677
      %vm685 = vmor %vm683, %vm684
      %v686 = vsel %vm685, %v677, %v682
      %v687 = vmul.f32 %v431, %v536
      %v688 = vmul.f32 %v432, %v546
      %v689 = vmul.f32 %v433, %v556
      %v690 = vmul.f32 %v434, %v566
      %v691 = vmul.f32 %v435, %v576
      %v692 = vmul.f32 %v436, %v586
      %v693 = vmul.f32 %v437, %v596
      %v694 = vmul.f32 %v438, %v606
      %v695 = vmul.f32 %v439, %v616
      %v696 = vmul.f32 %v440, %v626
      %v697 = vmul.f32 %v441, %v636
      %v698 = vmul.f32 %v442, %v646
      %v699 = vmul.f32 %v443, %v656
      %v700 = vmul.f32 %v444, %v666
      %v701 = vmul.f32 %v445, %v676
      %v702 = vmul.f32 %v446, %v686
      %v703 = vpack.c.bf16 %v688, %v687
      %v704 = vpack.c.bf16 %v690, %v689
      %v705 = vpack.c.bf16 %v692, %v691
      %v706 = vpack.c.bf16 %v694, %v693
      %v707 = vpack.c.bf16 %v696, %v695
      %v708 = vpack.c.bf16 %v698, %v697
      %v709 = vpack.c.bf16 %v700, %v699
      %v710 = vpack.c.bf16 %v702, %v701
      %v711 = vld [vmem:[%s2] sm:$0xf]
      %v712 = vld [vmem:[%s2 + $0x4] sm:$0xf]
      %v713 = vld [vmem:[%s2 + $0x8] sm:$0xf]
      %v714 = vld [vmem:[%s2 + $0xc] sm:$0xf]
      %v715 = vld [vmem:[%s2 + $0x10] sm:$0xf]
      %v716 = vld [vmem:[%s2 + $0x14] sm:$0xf]
      %v717 = vld [vmem:[%s2 + $0x18] sm:$0xf]
      %v718 = vld [vmem:[%s2 + $0x1c] sm:$0xf]
      %v719 = vld [vmem:[%s2 + $0x20] sm:$0xf]
      %v720 = vld [vmem:[%s2 + $0x24] sm:$0xf]
      %v721 = vld [vmem:[%s2 + $0x28] sm:$0xf]
      %v722 = vld [vmem:[%s2 + $0x2c] sm:$0xf]
      %v723 = vld [vmem:[%s2 + $0x30] sm:$0xf]
      %v724 = vld [vmem:[%s2 + $0x34] sm:$0xf]
      %v725 = vld [vmem:[%s2 + $0x38] sm:$0xf]
      %v726 = vld [vmem:[%s2 + $0x3c] sm:$0xf]
      %v727 = vld [vmem:[%s3] sm:$0x1]
      %v729 = vperm.slane %v727, 0
      %v747 = vunpack.c.l.b16 %v711
      %v748 = vunpack.c.l.b16 %v712
      %v749 = vunpack.c.l.b16 %v713
      %v750 = vunpack.c.l.b16 %v714
      %v751 = vunpack.c.l.b16 %v715
      %v752 = vunpack.c.l.b16 %v716
      %v753 = vunpack.c.l.b16 %v717
      %v754 = vunpack.c.l.b16 %v718
      %v755 = vunpack.c.l.b16 %v719
      %v756 = vunpack.c.l.b16 %v720
      %v757 = vunpack.c.l.b16 %v721
      %v758 = vunpack.c.l.b16 %v722
      %v759 = vunpack.c.l.b16 %v723
      %v760 = vunpack.c.l.b16 %v724
      %v761 = vunpack.c.l.b16 %v725
      %v762 = vunpack.c.l.b16 %v726
      %v763 = vpack.c.b16 %v748, %v747
      %v764 = vpack.c.b16 %v750, %v749
      %v765 = vpack.c.b16 %v752, %v751
      %v766 = vpack.c.b16 %v754, %v753
      %v767 = vpack.c.b16 %v756, %v755
      %v768 = vpack.c.b16 %v758, %v757
      %v769 = vpack.c.b16 %v760, %v759
      %v770 = vpack.c.b16 %v762, %v761
      %779 = vmatpush.bf16.msra.mxu0 %v770
      %780 = vmatpush.bf16.msra.mxu0 %v769
      %781 = vmatpush.bf16.msra.mxu0 %v768
      %782 = vmatpush.bf16.msra.mxu0 %v767
      %783 = vmatpush.bf16.msra.mxu0 %v766
      %784 = vmatpush.bf16.msra.mxu0 %v765
      %785 = vmatpush.bf16.msra.mxu0 %v764
      %786 = vmatpush.bf16.msra.mxu0 %v763
      %787 = vmatmul.bf16.gmra.mxu0 %v703
      %v788 = vpop.f32.mrf.mxu0
      %v789 = vadd.f32 %v729, %v788
      %v790 = vpop.f32.mrf.mxu0
      %v791 = vadd.f32 %v729, %v790
      %792 = vmatmul.bf16.gmra.mxu0 %v704
      %v793 = vpop.f32.mrf.mxu0
      %v794 = vadd.f32 %v729, %v793
      %v795 = vpop.f32.mrf.mxu0
      %v796 = vadd.f32 %v729, %v795
      %797 = vmatmul.bf16.gmra.mxu0 %v705
      %v798 = vpop.f32.mrf.mxu0
      %v799 = vadd.f32 %v729, %v798
      %v800 = vpop.f32.mrf.mxu0
      %v801 = vadd.f32 %v729, %v800
      %802 = vmatmul.bf16.gmra.mxu0 %v706
      %v803 = vpop.f32.mrf.mxu0
      %v804 = vadd.f32 %v729, %v803
      %v805 = vpop.f32.mrf.mxu0
      %v806 = vadd.f32 %v729, %v805
      %807 = vmatmul.bf16.gmra.mxu0 %v707
      %v808 = vpop.f32.mrf.mxu0
      %v809 = vadd.f32 %v729, %v808
      %v810 = vpop.f32.mrf.mxu0
      %v811 = vadd.f32 %v729, %v810
      %812 = vmatmul.bf16.gmra.mxu0 %v708
      %v813 = vpop.f32.mrf.mxu0
      %v814 = vadd.f32 %v729, %v813
      %v815 = vpop.f32.mrf.mxu0
      %v816 = vadd.f32 %v729, %v815
      %817 = vmatmul.bf16.gmra.mxu0 %v709
      %v818 = vpop.f32.mrf.mxu0
      %v819 = vadd.f32 %v729, %v818
      %v820 = vpop.f32.mrf.mxu0
      %v821 = vadd.f32 %v729, %v820
      %822 = vmatmul.bf16.gmra.mxu0 %v710
      %v823 = vpop.f32.mrf.mxu0
      %v824 = vadd.f32 %v729, %v823
      %v825 = vpop.f32.mrf.mxu0
      %v826 = vadd.f32 %v729, %v825
      %827 = vdwg.mxu0
      %vm828 = vcmask 130048
      %829 = vst.msk [vmem:[%s199] sm:$0xff] %vm828, %v789
      %830 = vst.msk [vmem:[%s199 + $0x8] sm:$0xff] %vm828, %v791
      %831 = vst.msk [vmem:[%s199 + $0x10] sm:$0xff] %vm828, %v794
      %832 = vst.msk [vmem:[%s199 + $0x18] sm:$0xff] %vm828, %v796
      %833 = vst.msk [vmem:[%s199 + $0x20] sm:$0xff] %vm828, %v799
      %834 = vst.msk [vmem:[%s199 + $0x28] sm:$0xff] %vm828, %v801
      %835 = vst.msk [vmem:[%s199 + $0x30] sm:$0xff] %vm828, %v804
      %836 = vst.msk [vmem:[%s199 + $0x38] sm:$0xff] %vm828, %v806
      %837 = vst.msk [vmem:[%s199 + $0x40] sm:$0xff] %vm828, %v809
      %838 = vst.msk [vmem:[%s199 + $0x48] sm:$0xff] %vm828, %v811
      %839 = vst.msk [vmem:[%s199 + $0x50] sm:$0xff] %vm828, %v814
      %840 = vst.msk [vmem:[%s199 + $0x58] sm:$0xff] %vm828, %v816
      %841 = vst.msk [vmem:[%s199 + $0x60] sm:$0xff] %vm828, %v819
      %842 = vst.msk [vmem:[%s199 + $0x68] sm:$0xff] %vm828, %v821
      %843 = vst.msk [vmem:[%s199 + $0x70] sm:$0xff] %vm828, %v824
      %844 = vst.msk [vmem:[%s199 + $0x78] sm:$0xff] %vm828, %v826
      %s845 = smul.u32 16, %s15
      %p846 = scmp.lt.s32.totalorder %s845, 31
      %s847 = scalar_select %p846, %s845, 31
      %s848 = smul.addr %s847, 8
      %s849 = scalar_lea.vmem %s4, %s848
      // Predicated region
      $region37: #{_forward_packed.1} parent=35 // pred_check
        %p850 = pneg %p122
      $region38: #{_forward_packed.1} parent=35 // pred_check_branch
        %852 = sbr.rel (%p850) target = $region40
      $region39: #{_forward_packed.1} parent=35 // pred_region
        %s853 = smul.u32 16, %s15
      $region40: #{_forward_packed.1} parent=35 // pred_fallthru
        _
    $region36: #{_forward_packed.1} parent=5 // pred_fallthru
      _
    %p854 = scmp.le.s32.totalorder 2, %s10
    // Predicated region
    $region41: #{_forward_packed.1} parent=5 // pred_check
      %p855 = pneg %p854
    $region42: #{_forward_packed.1} parent=5 // pred_check_branch
      %857 = sbr.rel (%p855) target = $region44
    $region43: #{_forward_packed.1} parent=5 // pred_region
      %s858 = ssub.s32 %s10, 2
      // Predicated region
      $region45: #{_forward_packed.1} parent=43 // pred_check
        %p859 = pneg %p128
      $region46: #{_forward_packed.1} parent=43 // pred_check_branch
        %861 = sbr.rel (%p859) target = $region48
      $region47: #{_forward_packed.1} parent=43 // pred_region
        %s862 = smul.u32 16, %s16
        %p863 = scmp.lt.s32.totalorder %s862, 31
        %s864 = scalar_select %p863, %s862, 31
        %s865 = smul.addr %s864, 8
        %s866 = scalar_lea.vmem %s4, %s865
      $region48: #{_forward_packed.1} parent=43 // pred_fallthru
        _
    $region44: #{_forward_packed.1} parent=5 // pred_fallthru
      _
  $region6: #{_forward_packed.1} parent=0 // loop_footer
    %s14 = sadd.s32 1, %s10
  $region7: #{_forward_packed.1} parent=0 // loop_footer_branch
    %9 = sbr.rel target = $region3
  $region8: #{_forward_packed.1} parent=0 // loop_exit
    _

</llo_original>
